<compile_context>
chip_gen: v7x
topology: tpu7x:2x2x1
jax: 0.10.0
libtpu: 0.0.40
codegen_flags: <defaults>
</compile_context>

<pallas_src>
import functools
import math

import jax
import jax.numpy as jnp
from jax.experimental import pallas as pl
from jax.experimental.pallas import tpu as pltpu

_EPS = 1e-12            # F.normalize default eps
_EPS_SQ = _EPS * _EPS   # clamp on sum-of-squares for the column (dim=0) branch


def _dc_loss_kernel(xr_ref, xtfr_ref, x_ref, xtf_ref, out_ref,
                    l_scr,
                    colsum_scr, colsqx_scr, colsqtf_scr, colprod_scr, gram_scr,
                    rowce_scr,
                    *, inv_t, n_valid, k_total, tile_n, need_mask):
    qi = pl.program_id(0)            # query row-tile of x
    ki = pl.program_id(1)            # key row-tile of x_tf (inner / fastest axis)
    last_q = pl.num_programs(0) - 1
    last_k = pl.num_programs(1) - 1

    # ---- init global accumulators at the very first grid point --------------
    @pl.when((qi == 0) & (ki == 0))
    def _():
        colsum_scr[...] = jnp.zeros_like(colsum_scr)
        colsqx_scr[...] = jnp.zeros_like(colsqx_scr)
        colsqtf_scr[...] = jnp.zeros_like(colsqtf_scr)
        colprod_scr[...] = jnp.zeros_like(colprod_scr)
        gram_scr[...] = jnp.zeros_like(gram_scr)
        rowce_scr[0] = jnp.float32(0.0)

    # ---- per query-tile row-sum accumulator ----------------------------------
    @pl.when(ki == 0)
    def _():
        l_scr[...] = jnp.zeros_like(l_scr)

    xr_q = xr_ref[...]       # row-normalized x, 1/t folded in   (TILE_N, K)
    xtfr_k = xtfr_ref[...]   # row-normalized x_tf               (TILE_N, K)

    # ---- (TILE_N, TILE_N) block of row-logits; fixed-max exp accumulation ----
    s = jax.lax.dot_general(xr_q, xtfr_k, (((1,), (1,)), ((), ())),
                            preferred_element_type=jnp.float32)
    e = jnp.exp(s - inv_t)   # fixed max: cosine <= 1  =>  s <= 1/t  =>  e in (0, 1]

    if need_mask:
        # Padded rows live only in the last key tile; mask them there only.
        @pl.when(ki != last_k)
        def _():
            l_scr[...] += jnp.sum(e, axis=1, keepdims=True)

        @pl.when(ki == last_k)
        def _():
            key_idx = ki * tile_n + jax.lax.broadcasted_iota(jnp.int32, e.shape, 1)
            l_scr[...] += jnp.sum(jnp.where(key_idx < n_valid, e, 0.0),
                                  axis=1, keepdims=True)
    else:
        l_scr[...] += jnp.sum(e, axis=1, keepdims=True)

    # ---- diagonal + column statistics: each row block contributes exactly once
    @pl.when(ki == qi)
    def _():
        # diag of row-logits directly from operands (1/t already folded in);
        # pad rows are all-zero so they contribute 0 here.
        diag = jnp.sum(xr_q * xtfr_k, axis=1, keepdims=True)      # (TILE_N, 1)
        rowce_scr[0] = rowce_scr[0] - jnp.sum(diag)
        # column statistics from the raw operands (pad rows are zero -> no-op)
        x_raw = x_ref[...].astype(jnp.float32)
        xtf_raw = xtf_ref[...].astype(jnp.float32)
        colsum_scr[...] += jnp.sum(x_raw, axis=0, keepdims=True)
        colsqx_scr[...] += jnp.sum(x_raw * x_raw, axis=0, keepdims=True)
        colsqtf_scr[...] += jnp.sum(xtf_raw * xtf_raw, axis=0, keepdims=True)
        colprod_scr[...] += jnp.sum(x_raw * xtf_raw, axis=0, keepdims=True)
        gram_scr[...] += jax.lax.dot_general(
            x_raw, xtf_raw, (((0,), (0,)), ((), ())),
            preferred_element_type=jnp.float32)                  # (K, K)

    # ---- finalize this query tile's logsumexp (fixed max = 1/t) --------------
    @pl.when(ki == last_k)
    def _():
        lse = inv_t + jnp.log(l_scr[...])                         # (TILE_N, 1)
        if need_mask:
            q_idx = qi * tile_n + jax.lax.broadcasted_iota(jnp.int32, lse.shape, 0)
            lse = jnp.where(q_idx < n_valid, lse, 0.0)
        rowce_scr[0] = rowce_scr[0] + jnp.sum(lse)

    # ---- global finalize ------------------------------------------------------
    @pl.when((qi == last_q) & (ki == last_k))
    def _():
        # entropy regularizer (matches PyTorch exactly: no eps inside log)
        p = colsum_scr[...]
        p = p / jnp.sum(p)
        loss_ne = math.log(k_total) + jnp.sum(p * jnp.log(p))

        # K x K branch: rank-1 scaling of the raw Gram (column norms + 1/t)
        inv_cx = jax.lax.rsqrt(jnp.maximum(colsqx_scr[...], _EPS_SQ))     # (1, K)
        inv_ctf = jax.lax.rsqrt(jnp.maximum(colsqtf_scr[...], _EPS_SQ))   # (1, K)
        logits_c = gram_scr[...] * (inv_ctf * inv_t)                      # (K, K)
        logits_c = logits_c * jnp.transpose(inv_cx)                       # row scale
        diag_c = colprod_scr[...] * inv_cx * inv_ctf * inv_t              # (1, K)

        # fixed max = 1/t here as well (column-normalized cosine <= 1)
        lse_c = inv_t + jnp.log(jnp.sum(jnp.exp(logits_c - inv_t),
                                        axis=1, keepdims=True))
        ce_cols = (jnp.sum(lse_c) - jnp.sum(diag_c)) / k_total
        ce_rows = rowce_scr[0] / n_valid

        out_ref[0, 0] = ce_rows + ce_cols + loss_ne


def _choose_tiling(n, max_tile=512):
    """Return (tile_n, n_padded) with tile_n a multiple of 8 and n_padded % tile_n == 0."""
    if n <= max_tile:
        tile = -(-n // 8) * 8                    # round N up to a multiple of 8
        return tile, tile                        # single tile
    tile = max_tile                              # multiple of 128
    return tile, -(-n // tile) * tile


def dc_loss(x, x_tf, lamda=0.5, tile_n=None):
    assert x.shape == x_tf.shape, "Inputs are required to have same shape"
    n, k = x.shape
    inv_t = 1.0 / float(lamda)

    if tile_n is None:
        tile_n, n_pad = _choose_tiling(n)
    else:
        assert tile_n % 8 == 0, "tile_n must be a multiple of 8"
        n_pad = -(-n // tile_n) * tile_n
    nq = n_pad // tile_n
    need_mask = n_pad != n

    x = x.astype(jnp.float32)
    x_tf = x_tf.astype(jnp.float32)

    # Hoisted row (dim=1) normalization, F.normalize semantics; 1/t folded into x.
    def _row_norm(a):
        nrm = jnp.sqrt(jnp.sum(a * a, axis=1, keepdims=True))
        return a / jnp.maximum(nrm, _EPS)

    xr = _row_norm(x) * inv_t
    xtfr = _row_norm(x_tf)

    if need_mask:
        pad = ((0, n_pad - n), (0, 0))
        xr = jnp.pad(xr, pad)
        xtfr = jnp.pad(xtfr, pad)
        x_p = jnp.pad(x, pad)
        xtf_p = jnp.pad(x_tf, pad)
    else:
        x_p, xtf_p = x, x_tf

    kernel = functools.partial(
        _dc_loss_kernel, inv_t=inv_t, n_valid=int(n), k_total=int(k),
        tile_n=int(tile_n), need_mask=need_mask)

    cost = pl.CostEstimate(
        flops=2 * n_pad * n_pad * k + 2 * n_pad * k * k + 3 * k * k,
        transcendentals=n_pad * n_pad + k * k + n_pad + k,
        bytes_accessed=4 * (n_pad * k * (nq + 3) + 1))

    out = pl.pallas_call(
        kernel,
        out_shape=jax.ShapeDtypeStruct((1, 1), jnp.float32),
        grid_spec=pltpu.PrefetchScalarGridSpec(
            num_scalar_prefetch=0,
            grid=(nq, nq),
            in_specs=[
                pl.BlockSpec((tile_n, k), lambda qi, ki: (qi, 0)),   # xr: query tile
                pl.BlockSpec((tile_n, k), lambda qi, ki: (ki, 0)),   # xtfr: key tile
                pl.BlockSpec((tile_n, k), lambda qi, ki: (qi, 0)),   # raw x (diag step)
                pl.BlockSpec((tile_n, k), lambda qi, ki: (qi, 0)),   # raw x_tf (diag step)
            ],
            out_specs=pl.BlockSpec(memory_space=pltpu.MemorySpace.SMEM),
            scratch_shapes=[
                pltpu.VMEM((tile_n, 1), jnp.float32),   # running row sum l
                pltpu.VMEM((1, k), jnp.float32),        # column sums of x (entropy)
                pltpu.VMEM((1, k), jnp.float32),        # column sum-of-squares of x
                pltpu.VMEM((1, k), jnp.float32),        # column sum-of-squares of x_tf
                pltpu.VMEM((1, k), jnp.float32),        # column sum of x*x_tf (KxK diag)
                pltpu.VMEM((k, k), jnp.float32),        # raw Gram x^T @ x_tf
                pltpu.SMEM((1,), jnp.float32),          # running sum of (lse - diag)
            ]),
        # TODO(synk): v7x dual-TC split of qi ("parallel") needs per-core partials.
        compiler_params=pltpu.CompilerParams(
            dimension_semantics=("arbitrary", "arbitrary")),
        cost_estimate=cost,
    )(xr, xtfr, x_p, xtf_p)
    return out[0, 0]


def _dc_loss_ref(x, x_tf, lamda=0.5):
    # Pure-JAX reference of the PyTorch forward, for verification.
    t = float(lamda)
    eps = 1e-12
    _, k = x.shape
    p = jnp.sum(x, axis=0)
    p = p / jnp.sum(p)
    loss_ne = math.log(k) + jnp.sum(p * jnp.log(p))

    def norm(a, axis):
        return a / jnp.maximum(jnp.linalg.norm(a, axis=axis, keepdims=True), eps)

    def ce(logits):
        lse = jax.scipy.special.logsumexp(logits, axis=1)
        return jnp.mean(lse - jnp.diag(logits))

    logits = (norm(x, 1) @ norm(x_tf, 1).T) / t
    logits_c = (norm(x, 0).T @ norm(x_tf, 0)) / t
    return ce(logits) + ce(logits_c) + loss_ne


if __name__ == "__main__":
    key = jax.random.PRNGKey(0)
    k1, k2, k3, k4, k5, k6 = jax.random.split(key, 6)

    # Small single-tile case (grid = (1, 1)).
    N, K = 8, 32
    x = jax.nn.softmax(jax.random.normal(k1, (N, K), dtype=jnp.float32), axis=-1)
    x_tf = jax.nn.softmax(jax.random.normal(k2, (N, K), dtype=jnp.float32), axis=-1)
    loss = dc_loss(x, x_tf, lamda=0.5)
    jax.block_until_ready(loss)
    ref = _dc_loss_ref(x, x_tf, lamda=0.5)
    assert jnp.allclose(loss, ref, atol=1e-4, rtol=1e-4), (loss, ref)

    # Multi-tile case exercising the tiled fixed-max path (grid = (4, 4)).
    N2, K2 = 32, 32
    x2 = jax.nn.softmax(jax.random.normal(k3, (N2, K2), dtype=jnp.float32), axis=-1)
    x2_tf = jax.nn.softmax(jax.random.normal(k4, (N2, K2), dtype=jnp.float32), axis=-1)
    loss2 = dc_loss(x2, x2_tf, lamda=0.5, tile_n=8)
    jax.block_until_ready(loss2)
    ref2 = _dc_loss_ref(x2, x2_tf, lamda=0.5)
    assert jnp.allclose(loss2, ref2, atol=1e-4, rtol=1e-4), (loss2, ref2)

    # Non-divisible N exercising the padded / masked path (N=20, tile=8 -> pad to 24).
    N3, K3 = 20, 32
    x3 = jax.nn.softmax(jax.random.normal(k5, (N3, K3), dtype=jnp.float32), axis=-1)
    x3_tf = jax.nn.softmax(jax.random.normal(k6, (N3, K3), dtype=jnp.float32), axis=-1)
    loss3 = dc_loss(x3, x3_tf, lamda=0.5, tile_n=8)
    jax.block_until_ready(loss3)
    ref3 = _dc_loss_ref(x3, x3_tf, lamda=0.5)
    assert jnp.allclose(loss3, ref3, atol=1e-4, rtol=1e-4), (loss3, ref3)

    print("KERNEL_OK")
</pallas_src>

<mosaic_0001>
module attributes {stable_mosaic.version = 11 : i64} {
  func.func @_dc_loss_kernel(%arg0: i32, %arg1: i32, %arg2: memref<8x32xf32, #tpu.memory_space<vmem>>, %arg3: memref<8x32xf32, #tpu.memory_space<vmem>>, %arg4: memref<8x32xf32, #tpu.memory_space<vmem>>, %arg5: memref<8x32xf32, #tpu.memory_space<vmem>>, %arg6: memref<1x1xf32, #tpu.memory_space<smem>>, %arg7: memref<8x1xf32, #tpu.memory_space<vmem>>, %arg8: memref<1x32xf32, #tpu.memory_space<vmem>>, %arg9: memref<1x32xf32, #tpu.memory_space<vmem>>, %arg10: memref<1x32xf32, #tpu.memory_space<vmem>>, %arg11: memref<1x32xf32, #tpu.memory_space<vmem>>, %arg12: memref<32x32xf32, #tpu.memory_space<vmem>>, %arg13: memref<1xf32, #tpu.memory_space<smem>>) attributes {dimension_semantics = [#tpu.dimension_semantics<arbitrary>, #tpu.dimension_semantics<arbitrary>], iteration_bounds = array<i64: 1, 1>, scalar_prefetch = 0 : i64, scratch_operands = 7 : i64, tpu.core_type = #tpu.core_type<tc>, window_params = [{transform_indices = @transform_0, window_bounds = array<i64: 8, 32>}, {transform_indices = @transform_1, window_bounds = array<i64: 8, 32>}, {transform_indices = @transform_2, window_bounds = array<i64: 8, 32>}, {transform_indices = @transform_3, window_bounds = array<i64: 8, 32>}, {transform_indices = @transform_4, window_bounds = array<i64: 1, 1>}]} {
    %c0_i32 = arith.constant 0 : i32
    %0 = arith.cmpi eq, %arg0, %c0_i32 : i32
    %c0_i32_0 = arith.constant 0 : i32
    %1 = arith.cmpi eq, %arg1, %c0_i32_0 : i32
    %2 = arith.andi %0, %1 : i1
    %3 = arith.extui %2 : i1 to i32
    %c0_i32_1 = arith.constant 0 : i32
    %4 = arith.cmpi ne, %3, %c0_i32_1 : i32
    scf.if %4 {
      %cst_19 = arith.constant 0.000000e+00 : f32
      %30 = vector.broadcast %cst_19 : f32 to vector<1x32xf32>
      %c0_20 = arith.constant 0 : index
      %c0_21 = arith.constant 0 : index
      %31 = vector.load %arg8[%c0_20, %c0_21] : memref<1x32xf32, #tpu.memory_space<vmem>>, vector<1x32xf32>
      tpu.vector_store %arg8[%c0_20, %c0_21], %30 {strides = array<i32>} : memref<1x32xf32, #tpu.memory_space<vmem>>, vector<1x32xf32>,
      %cst_22 = arith.constant 0.000000e+00 : f32
      %32 = vector.broadcast %cst_22 : f32 to vector<1x32xf32>
      %c0_23 = arith.constant 0 : index
      %c0_24 = arith.constant 0 : index
      %33 = vector.load %arg9[%c0_23, %c0_24] : memref<1x32xf32, #tpu.memory_space<vmem>>, vector<1x32xf32>
      tpu.vector_store %arg9[%c0_23, %c0_24], %32 {strides = array<i32>} : memref<1x32xf32, #tpu.memory_space<vmem>>, vector<1x32xf32>,
      %cst_25 = arith.constant 0.000000e+00 : f32
      %34 = vector.broadcast %cst_25 : f32 to vector<1x32xf32>
      %c0_26 = arith.constant 0 : index
      %c0_27 = arith.constant 0 : index
      %35 = vector.load %arg10[%c0_26, %c0_27] : memref<1x32xf32, #tpu.memory_space<vmem>>, vector<1x32xf32>
      tpu.vector_store %arg10[%c0_26, %c0_27], %34 {strides = array<i32>} : memref<1x32xf32, #tpu.memory_space<vmem>>, vector<1x32xf32>,
      %cst_28 = arith.constant 0.000000e+00 : f32
      %36 = vector.broadcast %cst_28 : f32 to vector<1x32xf32>
      %c0_29 = arith.constant 0 : index
      %c0_30 = arith.constant 0 : index
      %37 = vector.load %arg11[%c0_29, %c0_30] : memref<1x32xf32, #tpu.memory_space<vmem>>, vector<1x32xf32>
      tpu.vector_store %arg11[%c0_29, %c0_30], %36 {strides = array<i32>} : memref<1x32xf32, #tpu.memory_space<vmem>>, vector<1x32xf32>,
      %cst_31 = arith.constant 0.000000e+00 : f32
      %38 = vector.broadcast %cst_31 : f32 to vector<32x32xf32>
      %c0_32 = arith.constant 0 : index
      %c0_33 = arith.constant 0 : index
      %39 = vector.load %arg12[%c0_32, %c0_33] : memref<32x32xf32, #tpu.memory_space<vmem>>, vector<32x32xf32>
      tpu.vector_store %arg12[%c0_32, %c0_33], %38 {strides = array<i32>} : memref<32x32xf32, #tpu.memory_space<vmem>>, vector<32x32xf32>,
      %cst_34 = arith.constant 0.000000e+00 : f32
      %c0_35 = arith.constant 0 : index
      %40 = memref.load %arg13[%c0_35] : memref<1xf32, #tpu.memory_space<smem>>
      memref.store %cst_34, %arg13[%c0_35] : memref<1xf32, #tpu.memory_space<smem>>
    } else {
    }
    %c0_i32_2 = arith.constant 0 : i32
    %5 = arith.cmpi eq, %arg1, %c0_i32_2 : i32
    %6 = arith.extui %5 : i1 to i32
    %c0_i32_3 = arith.constant 0 : i32
    %7 = arith.cmpi ne, %6, %c0_i32_3 : i32
    scf.if %7 {
      %cst_19 = arith.constant 0.000000e+00 : f32
      %30 = vector.broadcast %cst_19 : f32 to vector<8x1xf32>
      %c0_20 = arith.constant 0 : index
      %c0_21 = arith.constant 0 : index
      %31 = vector.load %arg7[%c0_20, %c0_21] : memref<8x1xf32, #tpu.memory_space<vmem>>, vector<8x1xf32>
      tpu.vector_store %arg7[%c0_20, %c0_21], %30 {strides = array<i32>} : memref<8x1xf32, #tpu.memory_space<vmem>>, vector<8x1xf32>,
    } else {
    }
    %c0 = arith.constant 0 : index
    %c0_4 = arith.constant 0 : index
    %8 = vector.load %arg2[%c0, %c0_4] : memref<8x32xf32, #tpu.memory_space<vmem>>, vector<8x32xf32>
    %c0_5 = arith.constant 0 : index
    %c0_6 = arith.constant 0 : index
    %9 = vector.load %arg3[%c0_5, %c0_6] : memref<8x32xf32, #tpu.memory_space<vmem>>, vector<8x32xf32>
    %cst = arith.constant dense<0.000000e+00> : vector<8x8xf32>
    %10 = tpu.matmul %8, %9, %cst {dimension_numbers = #tpu.dot_dimension_numbers<[1], [1], [0], [0], [0, 0, 1, 0], [], []>} : vector<8x32xf32>, vector<8x32xf32>, vector<8x8xf32> -> vector<8x8xf32>
    %cst_7 = arith.constant 2.000000e+00 : f32
    %11 = vector.broadcast %cst_7 : f32 to vector<8x8xf32>
    %12 = arith.subf %10, %11 : vector<8x8xf32>
    %13 = math.exp %12 : vector<8x8xf32>
    %c0_8 = arith.constant 0 : index
    %c0_9 = arith.constant 0 : index
    %14 = vector.load %arg7[%c0_8, %c0_9] : memref<8x1xf32, #tpu.memory_space<vmem>>, vector<8x1xf32>
    %cst_10 = arith.constant dense<0.000000e+00> : vector<8xf32>
    %15 = vector.multi_reduction <add>, %13, %cst_10 [1] : vector<8x8xf32> to vector<8xf32>
    %16 = vector.shape_cast %15 : vector<8xf32> to vector<8x1xf32>
    %17 = arith.addf %14, %16 : vector<8x1xf32>
    %c0_11 = arith.constant 0 : index
    %c0_12 = arith.constant 0 : index
    %18 = vector.load %arg7[%c0_11, %c0_12] : memref<8x1xf32, #tpu.memory_space<vmem>>, vector<8x1xf32>
    tpu.vector_store %arg7[%c0_11, %c0_12], %17 {strides = array<i32>} : memref<8x1xf32, #tpu.memory_space<vmem>>, vector<8x1xf32>,
    %19 = arith.cmpi eq, %arg1, %arg0 : i32
    %20 = arith.extui %19 : i1 to i32
    %c0_i32_13 = arith.constant 0 : i32
    %21 = arith.cmpi ne, %20, %c0_i32_13 : i32
    scf.if %21 {
      %30 = arith.mulf %8, %9 : vector<8x32xf32>
      %cst_19 = arith.constant dense<0.000000e+00> : vector<8xf32>
      %31 = vector.multi_reduction <add>, %30, %cst_19 [1] : vector<8x32xf32> to vector<8xf32>
      %32 = vector.shape_cast %31 : vector<8xf32> to vector<8x1xf32>
      %c0_20 = arith.constant 0 : index
      %33 = memref.load %arg13[%c0_20] : memref<1xf32, #tpu.memory_space<smem>>
      %34 = vector.shape_cast %32 : vector<8x1xf32> to vector<1x8x1xf32>
      %cst_21 = arith.constant dense<0.000000e+00> : vector<1xf32>
      %35 = vector.multi_reduction <add>, %34, %cst_21 [1, 2] : vector<1x8x1xf32> to vector<1xf32>
      %36 = vector.shape_cast %35 : vector<1xf32> to vector<1x1x1xf32>
      %37 = vector.extract %36[0, 0, 0] : f32 from vector<1x1x1xf32>
      %38 = arith.subf %33, %37 : f32
      %c0_22 = arith.constant 0 : index
      %39 = memref.load %arg13[%c0_22] : memref<1xf32, #tpu.memory_space<smem>>
      memref.store %38, %arg13[%c0_22] : memref<1xf32, #tpu.memory_space<smem>>
      %c0_23 = arith.constant 0 : index
      %c0_24 = arith.constant 0 : index
      %40 = vector.load %arg4[%c0_23, %c0_24] : memref<8x32xf32, #tpu.memory_space<vmem>>, vector<8x32xf32>
      %c0_25 = arith.constant 0 : index
      %c0_26 = arith.constant 0 : index
      %41 = vector.load %arg5[%c0_25, %c0_26] : memref<8x32xf32, #tpu.memory_space<vmem>>, vector<8x32xf32>
      %c0_27 = arith.constant 0 : index
      %c0_28 = arith.constant 0 : index
      %42 = vector.load %arg8[%c0_27, %c0_28] : memref<1x32xf32, #tpu.memory_space<vmem>>, vector<1x32xf32>
      %cst_29 = arith.constant dense<0.000000e+00> : vector<32xf32>
      %43 = vector.multi_reduction <add>, %40, %cst_29 [0] : vector<8x32xf32> to vector<32xf32>
      %44 = vector.shape_cast %43 : vector<32xf32> to vector<1x32xf32>
      %45 = arith.addf %42, %44 : vector<1x32xf32>
      %c0_30 = arith.constant 0 : index
      %c0_31 = arith.constant 0 : index
      %46 = vector.load %arg8[%c0_30, %c0_31] : memref<1x32xf32, #tpu.memory_space<vmem>>, vector<1x32xf32>
      tpu.vector_store %arg8[%c0_30, %c0_31], %45 {strides = array<i32>} : memref<1x32xf32, #tpu.memory_space<vmem>>, vector<1x32xf32>,
      %c0_32 = arith.constant 0 : index
      %c0_33 = arith.constant 0 : index
      %47 = vector.load %arg9[%c0_32, %c0_33] : memref<1x32xf32, #tpu.memory_space<vmem>>, vector<1x32xf32>
      %48 = arith.mulf %40, %40 : vector<8x32xf32>
      %cst_34 = arith.constant dense<0.000000e+00> : vector<32xf32>
      %49 = vector.multi_reduction <add>, %48, %cst_34 [0] : vector<8x32xf32> to vector<32xf32>
      %50 = vector.shape_cast %49 : vector<32xf32> to vector<1x32xf32>
      %51 = arith.addf %47, %50 : vector<1x32xf32>
      %c0_35 = arith.constant 0 : index
      %c0_36 = arith.constant 0 : index
      %52 = vector.load %arg9[%c0_35, %c0_36] : memref<1x32xf32, #tpu.memory_space<vmem>>, vector<1x32xf32>
      tpu.vector_store %arg9[%c0_35, %c0_36], %51 {strides = array<i32>} : memref<1x32xf32, #tpu.memory_space<vmem>>, vector<1x32xf32>,
      %c0_37 = arith.constant 0 : index
      %c0_38 = arith.constant 0 : index
      %53 = vector.load %arg10[%c0_37, %c0_38] : memref<1x32xf32, #tpu.memory_space<vmem>>, vector<1x32xf32>
      %54 = arith.mulf %41, %41 : vector<8x32xf32>
      %cst_39 = arith.constant dense<0.000000e+00> : vector<32xf32>
      %55 = vector.multi_reduction <add>, %54, %cst_39 [0] : vector<8x32xf32> to vector<32xf32>
      %56 = vector.shape_cast %55 : vector<32xf32> to vector<1x32xf32>
      %57 = arith.addf %53, %56 : vector<1x32xf32>
      %c0_40 = arith.constant 0 : index
      %c0_41 = arith.constant 0 : index
      %58 = vector.load %arg10[%c0_40, %c0_41] : memref<1x32xf32, #tpu.memory_space<vmem>>, vector<1x32xf32>
      tpu.vector_store %arg10[%c0_40, %c0_41], %57 {strides = array<i32>} : memref<1x32xf32, #tpu.memory_space<vmem>>, vector<1x32xf32>,
      %c0_42 = arith.constant 0 : index
      %c0_43 = arith.constant 0 : index
      %59 = vector.load %arg11[%c0_42, %c0_43] : memref<1x32xf32, #tpu.memory_space<vmem>>, vector<1x32xf32>
      %60 = arith.mulf %40, %41 : vector<8x32xf32>
      %cst_44 = arith.constant dense<0.000000e+00> : vector<32xf32>
      %61 = vector.multi_reduction <add>, %60, %cst_44 [0] : vector<8x32xf32> to vector<32xf32>
      %62 = vector.shape_cast %61 : vector<32xf32> to vector<1x32xf32>
      %63 = arith.addf %59, %62 : vector<1x32xf32>
      %c0_45 = arith.constant 0 : index
      %c0_46 = arith.constant 0 : index
      %64 = vector.load %arg11[%c0_45, %c0_46] : memref<1x32xf32, #tpu.memory_space<vmem>>, vector<1x32xf32>
      tpu.vector_store %arg11[%c0_45, %c0_46], %63 {strides = array<i32>} : memref<1x32xf32, #tpu.memory_space<vmem>>, vector<1x32xf32>,
      %c0_47 = arith.constant 0 : index
      %c0_48 = arith.constant 0 : index
      %65 = vector.load %arg12[%c0_47, %c0_48] : memref<32x32xf32, #tpu.memory_space<vmem>>, vector<32x32xf32>
      %cst_49 = arith.constant dense<0.000000e+00> : vector<32x32xf32>
      %66 = tpu.matmul %40, %41, %cst_49 {dimension_numbers = #tpu.dot_dimension_numbers<[0], [0], [1], [1], [0, 1, 1, 1], [], []>} : vector<8x32xf32>, vector<8x32xf32>, vector<32x32xf32> -> vector<32x32xf32>
      %67 = arith.addf %65, %66 : vector<32x32xf32>
      %c0_50 = arith.constant 0 : index
      %c0_51 = arith.constant 0 : index
      %68 = vector.load %arg12[%c0_50, %c0_51] : memref<32x32xf32, #tpu.memory_space<vmem>>, vector<32x32xf32>
      tpu.vector_store %arg12[%c0_50, %c0_51], %67 {strides = array<i32>} : memref<32x32xf32, #tpu.memory_space<vmem>>, vector<32x32xf32>,
    } else {
    }
    %c0_i32_14 = arith.constant 0 : i32
    %22 = arith.cmpi eq, %arg1, %c0_i32_14 : i32
    %23 = arith.extui %22 : i1 to i32
    %c0_i32_15 = arith.constant 0 : i32
    %24 = arith.cmpi ne, %23, %c0_i32_15 : i32
    scf.if %24 {
      %c0_19 = arith.constant 0 : index
      %c0_20 = arith.constant 0 : index
      %30 = vector.load %arg7[%c0_19, %c0_20] : memref<8x1xf32, #tpu.memory_space<vmem>>, vector<8x1xf32>
      %31 = math.log %30 : vector<8x1xf32>
      %cst_21 = arith.constant 2.000000e+00 : f32
      %32 = vector.broadcast %cst_21 : f32 to vector<8x1xf32>
      %33 = arith.addf %32, %31 : vector<8x1xf32>
      %c0_22 = arith.constant 0 : index
      %34 = memref.load %arg13[%c0_22] : memref<1xf32, #tpu.memory_space<smem>>
      %35 = vector.shape_cast %33 : vector<8x1xf32> to vector<1x8x1xf32>
      %cst_23 = arith.constant dense<0.000000e+00> : vector<1xf32>
      %36 = vector.multi_reduction <add>, %35, %cst_23 [1, 2] : vector<1x8x1xf32> to vector<1xf32>
      %37 = vector.shape_cast %36 : vector<1xf32> to vector<1x1x1xf32>
      %38 = vector.extract %37[0, 0, 0] : f32 from vector<1x1x1xf32>
      %39 = arith.addf %34, %38 : f32
      %c0_24 = arith.constant 0 : index
      %40 = memref.load %arg13[%c0_24] : memref<1xf32, #tpu.memory_space<smem>>
      memref.store %39, %arg13[%c0_24] : memref<1xf32, #tpu.memory_space<smem>>
    } else {
    }
    %c0_i32_16 = arith.constant 0 : i32
    %25 = arith.cmpi eq, %arg0, %c0_i32_16 : i32
    %c0_i32_17 = arith.constant 0 : i32
    %26 = arith.cmpi eq, %arg1, %c0_i32_17 : i32
    %27 = arith.andi %25, %26 : i1
    %28 = arith.extui %27 : i1 to i32
    %c0_i32_18 = arith.constant 0 : i32
    %29 = arith.cmpi ne, %28, %c0_i32_18 : i32
    scf.if %29 {
      %c0_19 = arith.constant 0 : index
      %c0_20 = arith.constant 0 : index
      %30 = vector.load %arg8[%c0_19, %c0_20] : memref<1x32xf32, #tpu.memory_space<vmem>>, vector<1x32xf32>
      %31 = vector.shape_cast %30 : vector<1x32xf32> to vector<1x1x32xf32>
      %cst_21 = arith.constant dense<0.000000e+00> : vector<1xf32>
      %32 = vector.multi_reduction <add>, %31, %cst_21 [1, 2] : vector<1x1x32xf32> to vector<1xf32>
      %33 = vector.shape_cast %32 : vector<1xf32> to vector<1x1x1xf32>
      %34 = vector.extract %33[0, 0, 0] : f32 from vector<1x1x1xf32>
      %35 = vector.broadcast %34 : f32 to vector<1x32xf32>
      %36 = arith.divf %30, %35 : vector<1x32xf32>
      %37 = math.log %36 : vector<1x32xf32>
      %38 = arith.mulf %36, %37 : vector<1x32xf32>
      %39 = vector.shape_cast %38 : vector<1x32xf32> to vector<1x1x32xf32>
      %cst_22 = arith.constant dense<0.000000e+00> : vector<1xf32>
      %40 = vector.multi_reduction <add>, %39, %cst_22 [1, 2] : vector<1x1x32xf32> to vector<1xf32>
      %41 = vector.shape_cast %40 : vector<1xf32> to vector<1x1x1xf32>
      %42 = vector.extract %41[0, 0, 0] : f32 from vector<1x1x1xf32>
      %cst_23 = arith.constant 3.46573591 : f32
      %43 = arith.addf %cst_23, %42 : f32
      %c0_24 = arith.constant 0 : index
      %c0_25 = arith.constant 0 : index
      %44 = vector.load %arg9[%c0_24, %c0_25] : memref<1x32xf32, #tpu.memory_space<vmem>>, vector<1x32xf32>
      %cst_26 = arith.constant 1.000000e-24 : f32
      %45 = vector.broadcast %cst_26 : f32 to vector<1x32xf32>
      %46 = arith.maximumf %44, %45 : vector<1x32xf32>
      %47 = math.rsqrt %46 : vector<1x32xf32>
      %c0_27 = arith.constant 0 : index
      %c0_28 = arith.constant 0 : index
      %48 = vector.load %arg10[%c0_27, %c0_28] : memref<1x32xf32, #tpu.memory_space<vmem>>, vector<1x32xf32>
      %cst_29 = arith.constant 1.000000e-24 : f32
      %49 = vector.broadcast %cst_29 : f32 to vector<1x32xf32>
      %50 = arith.maximumf %48, %49 : vector<1x32xf32>
      %51 = math.rsqrt %50 : vector<1x32xf32>
      %c0_30 = arith.constant 0 : index
      %c0_31 = arith.constant 0 : index
      %52 = vector.load %arg12[%c0_30, %c0_31] : memref<32x32xf32, #tpu.memory_space<vmem>>, vector<32x32xf32>
      %cst_32 = arith.constant 2.000000e+00 : f32
      %53 = vector.broadcast %cst_32 : f32 to vector<1x32xf32>
      %54 = arith.mulf %51, %53 : vector<1x32xf32>
      %55 = vector.broadcast %54 : vector<1x32xf32> to vector<32x32xf32>
      %56 = arith.mulf %52, %55 : vector<32x32xf32>
      %57 = tpu.transpose %47, [1, 0] : vector<1x32xf32> -> vector<32x1xf32>
      %58 = vector.broadcast %57 : vector<32x1xf32> to vector<32x32xf32>
      %59 = arith.mulf %56, %58 : vector<32x32xf32>
      %c0_33 = arith.constant 0 : index
      %c0_34 = arith.constant 0 : index
      %60 = vector.load %arg11[%c0_33, %c0_34] : memref<1x32xf32, #tpu.memory_space<vmem>>, vector<1x32xf32>
      %61 = arith.mulf %60, %47 : vector<1x32xf32>
      %62 = arith.mulf %61, %51 : vector<1x32xf32>
      %cst_35 = arith.constant 2.000000e+00 : f32
      %63 = vector.broadcast %cst_35 : f32 to vector<1x32xf32>
      %64 = arith.mulf %62, %63 : vector<1x32xf32>
      %cst_36 = arith.constant 2.000000e+00 : f32
      %65 = vector.broadcast %cst_36 : f32 to vector<32x32xf32>
      %66 = arith.subf %59, %65 : vector<32x32xf32>
      %67 = math.exp %66 : vector<32x32xf32>
      %cst_37 = arith.constant dense<0.000000e+00> : vector<32xf32>
      %68 = vector.multi_reduction <add>, %67, %cst_37 [1] : vector<32x32xf32> to vector<32xf32>
      %69 = vector.shape_cast %68 : vector<32xf32> to vector<32x1xf32>
      %70 = math.log %69 : vector<32x1xf32>
      %cst_38 = arith.constant 2.000000e+00 : f32
      %71 = vector.broadcast %cst_38 : f32 to vector<32x1xf32>
      %72 = arith.addf %71, %70 : vector<32x1xf32>
      %73 = vector.shape_cast %72 : vector<32x1xf32> to vector<1x32x1xf32>
      %cst_39 = arith.constant dense<0.000000e+00> : vector<1xf32>
      %74 = vector.multi_reduction <add>, %73, %cst_39 [1, 2] : vector<1x32x1xf32> to vector<1xf32>
      %75 = vector.shape_cast %74 : vector<1xf32> to vector<1x1x1xf32>
      %76 = vector.extract %75[0, 0, 0] : f32 from vector<1x1x1xf32>
      %77 = vector.shape_cast %64 : vector<1x32xf32> to vector<1x1x32xf32>
      %cst_40 = arith.constant dense<0.000000e+00> : vector<1xf32>
      %78 = vector.multi_reduction <add>, %77, %cst_40 [1, 2] : vector<1x1x32xf32> to vector<1xf32>
      %79 = vector.shape_cast %78 : vector<1xf32> to vector<1x1x1xf32>
      %80 = vector.extract %79[0, 0, 0] : f32 from vector<1x1x1xf32>
      %81 = arith.subf %76, %80 : f32
      %cst_41 = arith.constant 3.200000e+01 : f32
      %82 = arith.divf %81, %cst_41 : f32
      %c0_42 = arith.constant 0 : index
      %83 = memref.load %arg13[%c0_42] : memref<1xf32, #tpu.memory_space<smem>>
      %cst_43 = arith.constant 8.000000e+00 : f32
      %84 = arith.divf %83, %cst_43 : f32
      %85 = arith.addf %84, %82 : f32
      %86 = arith.addf %85, %43 : f32
      %c0_44 = arith.constant 0 : index
      %c0_45 = arith.constant 0 : index
      %87 = memref.load %arg6[%c0_44, %c0_45] : memref<1x1xf32, #tpu.memory_space<smem>>
      memref.store %86, %arg6[%c0_44, %c0_45] : memref<1x1xf32, #tpu.memory_space<smem>>
    } else {
    }
    return
  }
  func.func @transform_0(%arg0: i32, %arg1: i32) -> (i32, i32) {
    %c0_i32 = arith.constant 0 : i32
    %c0_i32_0 = arith.constant 0 : i32
    return %arg0, %c0_i32 : i32, i32
  }
  func.func @transform_1(%arg0: i32, %arg1: i32) -> (i32, i32) {
    %c0_i32 = arith.constant 0 : i32
    %c0_i32_0 = arith.constant 0 : i32
    return %arg1, %c0_i32 : i32, i32
  }
  func.func @transform_2(%arg0: i32, %arg1: i32) -> (i32, i32) {
    %c0_i32 = arith.constant 0 : i32
    %c0_i32_0 = arith.constant 0 : i32
    return %arg0, %c0_i32 : i32, i32
  }
  func.func @transform_3(%arg0: i32, %arg1: i32) -> (i32, i32) {
    %c0_i32 = arith.constant 0 : i32
    %c0_i32_0 = arith.constant 0 : i32
    return %arg0, %c0_i32 : i32, i32
  }
  func.func @transform_4(%arg0: i32, %arg1: i32) -> (i32, i32) {
    %c0_i32 = arith.constant 0 : i32
    %c0_i32_0 = arith.constant 0 : i32
    %c0_i32_1 = arith.constant 0 : i32
    return %c0_i32, %c0_i32_0 : i32, i32
  }
}

</mosaic_0001>

<llo_original>
// kernel: tpu_custom_call.1
$region0: #{tpu_custom_call.1}
  #allocation0 [shape = 'u32[]', space=smem, size = 0x4, offset = 0x4, fixed_abs, tag = 'smem constant byte address 0x4 - core index']
  #allocation1 [shape = 'u32[144,128]{1,0:T(1,128)}', space=vmem, size = 0x12000, scoped, tag = 'internal scratch']
  #allocation2 [shape = 'f32[8,1]{1,0:T(8,128)}', space=vmem, size = 0x1000, scoped, tag = 'scratch operand']
  #allocation3 [shape = 'f32[1,32]{1,0:T(1,128)}', space=vmem, size = 0x200, scoped, tag = 'scratch operand']
  #allocation4 [shape = 'f32[1,32]{1,0:T(1,128)}', space=vmem, size = 0x200, scoped, tag = 'scratch operand']
  #allocation5 [shape = 'f32[1,32]{1,0:T(1,128)}', space=vmem, size = 0x200, scoped, tag = 'scratch operand']
  #allocation6 [shape = 'f32[1,32]{1,0:T(1,128)}', space=vmem, size = 0x200, scoped, tag = 'scratch operand']
  #allocation7 [shape = 'f32[32,32]{1,0:T(8,128)}', space=vmem, size = 0x4000, scoped, tag = 'scratch operand']
  #allocation8 [shape = 'f32[1]{0:T(128)}', space=smem, size = 0x200, scoped, tag = 'scratch operand']
  %s0 = inlined_call_operand.hbm [shape: f32[8,32], index: 0, kind: input, shape index: {}]
  %s1 = inlined_call_operand.hbm [shape: f32[8,32], index: 1, kind: input, shape index: {}]
  %s2 = inlined_call_operand.hbm [shape: f32[8,32], index: 2, kind: input, shape index: {}]
  %s3 = inlined_call_operand.vmem [shape: f32[8,32], index: 3, kind: input, shape index: {}]
  %s4 = inlined_call_operand.hbm [shape: f32[1,1], index: 4, kind: output, shape index: {}]
  %s5 = sld [smem:[#allocation0]]
  $region58: #{tpu_custom_call.1} parent=0
    _
  %s7 = ssub.s32 1, %s5
  %s8 = scalar_select 0, %s7, %s5
  $region1: #{tpu_custom_call.1} parent=0
    #allocation9 [shape = 'u8[4096]{0}', space=vmem, size = 0x1000, scoped, tag = 'input window, operand 0, single buffered']
    #allocation10 [shape = 's32[1]{0}', space=sflag, size = 0x4, scoped, tag = 'scoped memory for tpu_custom_call.1']
    #allocation11 [shape = 's32[1]{0}', space=sflag, size = 0x4, scoped, tag = 'scoped memory for tpu_custom_call.1']
    #allocation12 [shape = 'u8[4096]{0}', space=vmem, size = 0x1000, scoped, tag = 'input window, operand 1, single buffered']
    #allocation13 [shape = 's32[1]{0}', space=sflag, size = 0x4, scoped, tag = 'scoped memory for tpu_custom_call.1']
    #allocation14 [shape = 'u8[4096]{0}', space=vmem, size = 0x1000, scoped, tag = 'input window, operand 2, single buffered']
    #allocation15 [shape = 'u8[512]{0}', space=smem, size = 0x200, scoped, tag = 'output window, operand 0, single buffered']
    %9 = vsyncpa [#allocation10], 0
    %10 = vsyncpa [#allocation13], 0
    %11 = vsyncpa [#allocation11], 0
    // Predicated region
    $region2: #{tpu_custom_call.1} parent=1 // pred_check
      _
    $region3: #{tpu_custom_call.1} parent=1 // pred_check_branch
      %13 = sbr.rel (0) target = $region5
    $region4: #{tpu_custom_call.1} parent=1 // pred_region
      %s15 = ssub.s32 128, 128
      %16 = vsyncadd [#allocation10], %s15
      %s18 = sshll.u32 [#allocation9], 4
      %s19 = int_to_ptr.vmem [resolvable:$true] %s18
      %21 = dma.hbm_to_vmem [thread:$0]  %s0, 128, %s19, [#allocation10]
    $region5: #{tpu_custom_call.1} parent=1 // pred_fallthru
      _
    // Predicated region
    $region6: #{tpu_custom_call.1} parent=1 // pred_check
      _
    $region7: #{tpu_custom_call.1} parent=1 // pred_check_branch
      %23 = sbr.rel (0) target = $region9
    $region8: #{tpu_custom_call.1} parent=1 // pred_region
      %s25 = ssub.s32 128, 128
      %26 = vsyncadd [#allocation13], %s25
      %s28 = sshll.u32 [#allocation12], 4
      %s29 = int_to_ptr.vmem [resolvable:$true] %s28
      %31 = dma.hbm_to_vmem [thread:$0]  %s1, 128, %s29, [#allocation13]
    $region9: #{tpu_custom_call.1} parent=1 // pred_fallthru
      _
    // Predicated region
    $region10: #{tpu_custom_call.1} parent=1 // pred_check
      _
    $region11: #{tpu_custom_call.1} parent=1 // pred_check_branch
      %33 = sbr.rel (0) target = $region13
    $region12: #{tpu_custom_call.1} parent=1 // pred_region
      %s35 = ssub.s32 128, 128
      %36 = vsyncadd [#allocation13], %s35
      %s38 = sshll.u32 [#allocation14], 4
      %s39 = int_to_ptr.vmem [resolvable:$true] %s38
      %41 = dma.hbm_to_vmem [thread:$0]  %s2, 128, %s39, [#allocation13]
    $region13: #{tpu_custom_call.1} parent=1 // pred_fallthru
      _
    // Predicated region
    $region14: #{tpu_custom_call.1} parent=1 // pred_check
      _
    $region15: #{tpu_custom_call.1} parent=1 // pred_check_branch
      %43 = sbr.rel (0) target = $region17
    $region16: #{tpu_custom_call.1} parent=1 // pred_region
      _
    $region17: #{tpu_custom_call.1} parent=1 // pred_fallthru
      _
    // Predicated region
    $region18: #{tpu_custom_call.1} parent=1 // pred_check
      _
    $region19: #{tpu_custom_call.1} parent=1 // pred_check_branch
      %45 = sbr.rel (0) target = $region21
    $region20: #{tpu_custom_call.1} parent=1 // pred_region
      %46 = dma.done [#allocation10], 128
    $region21: #{tpu_custom_call.1} parent=1 // pred_fallthru
      _
    // Predicated region
    $region22: #{tpu_custom_call.1} parent=1 // pred_check
      _
    $region23: #{tpu_custom_call.1} parent=1 // pred_check_branch
      %48 = sbr.rel (0) target = $region25
    $region24: #{tpu_custom_call.1} parent=1 // pred_region
      %49 = dma.done [#allocation13], 128
    $region25: #{tpu_custom_call.1} parent=1 // pred_fallthru
      _
    // Predicated region
    $region26: #{tpu_custom_call.1} parent=1 // pred_check
      _
    $region27: #{tpu_custom_call.1} parent=1 // pred_check_branch
      %51 = sbr.rel (0) target = $region29
    $region28: #{tpu_custom_call.1} parent=1 // pred_region
      %52 = dma.done [#allocation13], 128
    $region29: #{tpu_custom_call.1} parent=1 // pred_fallthru
      _
    %p53 = scmp.eq.s32.totalorder 0, 0
    %p54 = scmp.eq.s32.totalorder 0, 0
    %p55 = pnand %p53, %p54
    %p56 = pneg %p55
    // Predicated region
    $region30: #{tpu_custom_call.1} parent=1 // pred_check
      _
    $region31: #{tpu_custom_call.1} parent=1 // pred_check_branch
      %58 = sbr.rel (%p55) target = $region33
    $region32: #{tpu_custom_call.1} parent=1 // pred_region
      %vm59 = vcmask 253952
      %60 = vst.msk [vmem:[#allocation3] sm:$0x1] %vm59, 0.0
      %61 = vst.msk [vmem:[#allocation4] sm:$0x1] %vm59, 0.0
      %62 = vst.msk [vmem:[#allocation5] sm:$0x1] %vm59, 0.0
      %63 = vst.msk [vmem:[#allocation6] sm:$0x1] %vm59, 0.0
      %vm64 = vcmask 261120
      %65 = vst.msk [vmem:[#allocation7] sm:$0xff] %vm64, 0.0
      %66 = vst.msk [vmem:[#allocation7 + $0x8] sm:$0xff] %vm64, 0.0
      %67 = vst.msk [vmem:[#allocation7 + $0x10] sm:$0xff] %vm64, 0.0
      %68 = vst.msk [vmem:[#allocation7 + $0x18] sm:$0xff] %vm64, 0.0
      %s69 = scalar_lea.smem [#allocation8], 0
      %70 = sst [smem:[%s69]] 0.0
    $region33: #{tpu_custom_call.1} parent=1 // pred_fallthru
      _
    // Predicated region
    $region34: #{tpu_custom_call.1} parent=1 // pred_check
      %p71 = pneg %p54
    $region35: #{tpu_custom_call.1} parent=1 // pred_check_branch
      %73 = sbr.rel (%p71) target = $region37
    $region36: #{tpu_custom_call.1} parent=1 // pred_region
      %vm74 = vcmask 7168
      %75 = vst.msk [vmem:[#allocation2] sm:$0xff] %vm74, 0.0
    $region37: #{tpu_custom_call.1} parent=1 // pred_fallthru
      _
    %v76 = vld [vmem:[#allocation9] sm:$0xff]
    %v77 = vld [vmem:[#allocation12] sm:$0xff]
    %vm78 = vcmask 261120
    %v80 = vsel %vm78, %v76, 0
    %v83 = vsel %vm78, %v77, 0
    %85 = vmatprep.subr.mxu0 0.0
    %86 = vmatpush1.xpose.msra.mxu0 %v83
    %87 = vmatprep.subr.mxu0 0.0
    %88 = vmatpush1.xpose.msra.mxu0 0.0
    %89 = vmatprep.subr.mxu0 0.0
    %90 = vmatpush1.xpose.msra.mxu0 0.0
    %91 = vmatprep.subr.mxu0 0.0
    %92 = vmatpush1.xpose.msra.mxu0 0.0
    %93 = vmatprep.subr.mxu0 0.0
    %94 = vmatpush1.xpose.msra.mxu0 0.0
    %95 = vmatprep.subr.mxu0 0.0
    %96 = vmatpush1.xpose.msra.mxu0 0.0
    %97 = vmatprep.subr.mxu0 0.0
    %98 = vmatpush1.xpose.msra.mxu0 0.0
    %99 = vmatprep.subr.mxu0 0.0
    %100 = vmatpush1.xpose.msra.mxu0 0.0
    %101 = vmatprep.subr.mxu0 0.0
    %102 = vmatpush1.xpose.msra.mxu0 0.0
    %103 = vmatprep.subr.mxu0 0.0
    %104 = vmatpush1.xpose.msra.mxu0 0.0
    %105 = vmatprep.subr.mxu0 0.0
    %106 = vmatpush1.xpose.msra.mxu0 0.0
    %107 = vmatprep.subr.mxu0 0.0
    %108 = vmatpush1.xpose.msra.mxu0 0.0
    %109 = vmatprep.subr.mxu0 0.0
    %110 = vmatpush1.xpose.msra.mxu0 0.0
    %111 = vmatprep.subr.mxu0 0.0
    %112 = vmatpush1.xpose.msra.mxu0 0.0
    %113 = vmatprep.subr.mxu0 0.0
    %114 = vmatpush1.xpose.msra.mxu0 0.0
    %115 = vmatprep.subr.mxu0 0.0
    %116 = vmatpush1.xpose.msra.mxu0 0.0
    %117 = vmatprep.subr.mxu0 0.0
    %118 = vmatpush1.xpose.msra.mxu0 0.0
    %119 = vmatprep.subr.mxu0 0.0
    %120 = vmatpush1.xpose.msra.mxu0 0.0
    %121 = vmatprep.subr.mxu0 0.0
    %122 = vmatpush1.xpose.msra.mxu0 0.0
    %123 = vmatprep.subr.mxu0 0.0
    %124 = vmatpush1.xpose.msra.mxu0 0.0
    %125 = vmatprep.subr.mxu0 0.0
    %126 = vmatpush1.xpose.msra.mxu0 0.0
    %127 = vmatprep.subr.mxu0 0.0
    %128 = vmatpush1.xpose.msra.mxu0 0.0
    %129 = vmatprep.subr.mxu0 0.0
    %130 = vmatpush1.xpose.msra.mxu0 0.0
    %131 = vmatprep.subr.mxu0 0.0
    %132 = vmatpush1.xpose.msra.mxu0 0.0
    %133 = vmatprep.subr.mxu0 0.0
    %134 = vmatpush1.xpose.msra.mxu0 0.0
    %135 = vmatprep.subr.mxu0 0.0
    %136 = vmatpush1.xpose.msra.mxu0 0.0
    %137 = vmatprep.subr.mxu0 0.0
    %138 = vmatpush1.xpose.msra.mxu0 0.0
    %139 = vmatprep.subr.mxu0 0.0
    %140 = vmatpush1.xpose.msra.mxu0 0.0
    %141 = vmatprep.subr.mxu0 0.0
    %142 = vmatpush1.xpose.msra.mxu0 0.0
    %143 = vmatprep.subr.mxu0 0.0
    %144 = vmatpush1.xpose.msra.mxu0 0.0
    %145 = vmatprep.subr.mxu0 0.0
    %146 = vmatpush1.xpose.msra.mxu0 0.0
    %147 = vmatprep.subr.mxu0 0.0
    %148 = vmatpush1.xpose.msra.mxu0 0.0
    %149 = vmatprep.mubr.f32.mxu0 0.0
    %150 = vmatmul.mubr.f32.gmra.mrb[0].mxu0 %v80
    %v151 = vpop.f32.mrb[0].mxu0
    %v152 = vadd.f32 0.0, %v151
    %v153 = vpop.f32.mrb[0].mxu0
    %154 = vdwg.mxu0
    %v155 = vsub.f32 %v152, 2.0
    %v156 = vmul.f32 %v155, 1.442695
    %v157 = vpow.pop %v156
    %v158 = vld [vmem:[#allocation2] sm:$0xff]
    %vm159 = vcmask 64512
    %v160 = vsel %vm159, %v157, 0.0
    %161 = vadd.xlane.f32.xlu0 %v160
    %v162 = vpop.xlane.xlu0 %161
    %v163 = vadd.f32 %v158, %v162
    %vm164 = vcmask 7168
    %165 = vst.msk [vmem:[#allocation2] sm:$0xff] %vm164, %v163
    %p166 = scmp.eq.s32.totalorder 0, 0
    // Predicated region
    $region38: #{tpu_custom_call.1} parent=1 // pred_check
      %p167 = pneg %p166
    $region39: #{tpu_custom_call.1} parent=1 // pred_check_branch
      %169 = sbr.rel (%p167) target = $region41
    $region40: #{tpu_custom_call.1} parent=1 // pred_region
      %v170 = vmul.f32 %v76, %v77
      %v171 = vsel %vm78, %v170, 0.0
      %172 = vadd.xlane.f32.xlu0 %v171
      %v173 = vpop.xlane.xlu0 %172
      %s174 = sld [smem:[#allocation8]]
      %v175 = vsel %vm164, %v173, 0.0
      %176 = vadd.xlane.f32.xlu0 %v175
      %v177 = vpop.xlane.xlu0 %176
      %v178 = vrot.slane %v177, 4
      %v179 = vadd.f32 %v177, %v178
      %v180 = vrot.slane %v179, 2
      %v181 = vadd.f32 %v179, %v180
      %v182 = vrot.slane %v181, 1
      %v183 = vadd.f32 %v181, %v182
      %s184 = vtos %v183
      %s185 = ssub.f32 %s174, %s184
      %s186 = scalar_lea.smem [#allocation8], 0
      %187 = sst [smem:[%s186]] %s185
      %v188 = vld [vmem:[#allocation14] sm:$0xff]
      %v189 = vld [vmem:[%s3] sm:$0xff]
      %v190 = vld [vmem:[#allocation3] sm:$0x1]
      %v191 = vsel %vm78, %v188, 0.0
      %v192 = vrot.slane %v191, 4
      %v193 = vadd.f32 %v191, %v192
      %v194 = vrot.slane %v193, 2
      %v195 = vadd.f32 %v193, %v194
      %v196 = vrot.slane %v195, 1
      %v197 = vadd.f32 %v195, %v196
      %v198 = vadd.f32 %v190, %v197
      %vm199 = vcmask 253952
      %200 = vst.msk [vmem:[#allocation3] sm:$0x1] %vm199, %v198
      %v201 = vld [vmem:[#allocation4] sm:$0x1]
      %v202 = vmul.f32 %v188, %v188
      %v203 = vsel %vm78, %v202, 0.0
      %v204 = vrot.slane %v203, 4
      %v205 = vadd.f32 %v203, %v204
      %v206 = vrot.slane %v205, 2
      %v207 = vadd.f32 %v205, %v206
      %v208 = vrot.slane %v207, 1
      %v209 = vadd.f32 %v207, %v208
      %v210 = vadd.f32 %v201, %v209
      %211 = vst.msk [vmem:[#allocation4] sm:$0x1] %vm199, %v210
      %v212 = vld [vmem:[#allocation5] sm:$0x1]
      %v213 = vmul.f32 %v189, %v189
      %v214 = vsel %vm78, %v213, 0.0
      %v215 = vrot.slane %v214, 4
      %v216 = vadd.f32 %v214, %v215
      %v217 = vrot.slane %v216, 2
      %v218 = vadd.f32 %v216, %v217
      %v219 = vrot.slane %v218, 1
      %v220 = vadd.f32 %v218, %v219
      %v221 = vadd.f32 %v212, %v220
      %222 = vst.msk [vmem:[#allocation5] sm:$0x1] %vm199, %v221
      %v223 = vld [vmem:[#allocation6] sm:$0x1]
      %v224 = vmul.f32 %v188, %v189
      %v225 = vsel %vm78, %v224, 0.0
      %v226 = vrot.slane %v225, 4
      %v227 = vadd.f32 %v225, %v226
      %v228 = vrot.slane %v227, 2
      %v229 = vadd.f32 %v227, %v228
      %v230 = vrot.slane %v229, 1
      %v231 = vadd.f32 %v229, %v230
      %v232 = vadd.f32 %v223, %v231
      %233 = vst.msk [vmem:[#allocation6] sm:$0x1] %vm199, %v232
      %v234 = vld [vmem:[#allocation7] sm:$0xff]
      %v235 = vld [vmem:[#allocation7 + $0x8] sm:$0xff]
      %v236 = vld [vmem:[#allocation7 + $0x10] sm:$0xff]
      %v237 = vld [vmem:[#allocation7 + $0x18] sm:$0xff]
      %238 = vxpose.xlu0.b32.start [1/16] %v188, 128
      %239 = vxpose.xlu0.b32.cont [2/16] 0.0, 128
      %240 = vxpose.xlu0.b32.cont [3/16] 0.0, 128
      %241 = vxpose.xlu0.b32.cont [4/16] 0.0, 128
      %242 = vxpose.xlu0.b32.cont [5/16] 0.0, 128
      %243 = vxpose.xlu0.b32.cont [6/16] 0.0, 128
      %244 = vxpose.xlu0.b32.cont [7/16] 0.0, 128
      %245 = vxpose.xlu0.b32.cont [8/16] 0.0, 128
      %246 = vxpose.xlu0.b32.cont [9/16] 0.0, 128
      %247 = vxpose.xlu0.b32.cont [10/16] 0.0, 128
      %248 = vxpose.xlu0.b32.cont [11/16] 0.0, 128
      %249 = vxpose.xlu0.b32.cont [12/16] 0.0, 128
      %250 = vxpose.xlu0.b32.cont [13/16] 0.0, 128
      %251 = vxpose.xlu0.b32.cont [14/16] 0.0, 128
      %252 = vxpose.xlu0.b32.cont [15/16] 0.0, 128
      %253 = vxpose.xlu0.b32.end [16/16] 0.0, 128
      %v254 = vpop.trf.xlu0
      %v255 = vpop.trf.xlu0
      %v256 = vpop.trf.xlu0
      %v257 = vpop.trf.xlu0
      %v258 = vpop.trf.xlu0
      %v259 = vpop.trf.xlu0
      %v260 = vpop.trf.xlu0
      %v261 = vpop.trf.xlu0
      %v262 = vpop.trf.xlu0
      %v263 = vpop.trf.xlu0
      %v264 = vpop.trf.xlu0
      %v265 = vpop.trf.xlu0
      %v266 = vpop.trf.xlu0
      %v267 = vpop.trf.xlu0
      %v268 = vpop.trf.xlu0
      %v269 = vpop.trf.xlu0
      %v271 = vsel %vm159, %v254, 0
      %v274 = vsel %vm159, %v255, 0
      %v277 = vsel %vm159, %v256, 0
      %v280 = vsel %vm159, %v257, 0
      %282 = vmatprep.subr.mxu0 0.0
      %283 = vmatpush1.msra.mxu0 %v189
      %284 = vmatprep.subr.mxu0 0.0
      %285 = vmatpush1.msra.mxu0 0.0
      %286 = vmatprep.subr.mxu0 0.0
      %287 = vmatpush1.msra.mxu0 0.0
      %288 = vmatprep.subr.mxu0 0.0
      %289 = vmatpush1.msra.mxu0 0.0
      %290 = vmatprep.subr.mxu0 0.0
      %291 = vmatpush1.msra.mxu0 0.0
      %292 = vmatprep.subr.mxu0 0.0
      %293 = vmatpush1.msra.mxu0 0.0
      %294 = vmatprep.subr.mxu0 0.0
      %295 = vmatpush1.msra.mxu0 0.0
      %296 = vmatprep.subr.mxu0 0.0
      %297 = vmatpush1.msra.mxu0 0.0
      %298 = vmatprep.subr.mxu0 0.0
      %299 = vmatpush1.msra.mxu0 0.0
      %300 = vmatprep.subr.mxu0 0.0
      %301 = vmatpush1.msra.mxu0 0.0
      %302 = vmatprep.subr.mxu0 0.0
      %303 = vmatpush1.msra.mxu0 0.0
      %304 = vmatprep.subr.mxu0 0.0
      %305 = vmatpush1.msra.mxu0 0.0
      %306 = vmatprep.subr.mxu0 0.0
      %307 = vmatpush1.msra.mxu0 0.0
      %308 = vmatprep.subr.mxu0 0.0
      %309 = vmatpush1.msra.mxu0 0.0
      %310 = vmatprep.subr.mxu0 0.0
      %311 = vmatpush1.msra.mxu0 0.0
      %312 = vmatprep.subr.mxu0 0.0
      %313 = vmatpush1.msra.mxu0 0.0
      %314 = vmatprep.subr.mxu0 0.0
      %315 = vmatpush1.msra.mxu0 0.0
      %316 = vmatprep.subr.mxu0 0.0
      %317 = vmatpush1.msra.mxu0 0.0
      %318 = vmatprep.subr.mxu0 0.0
      %319 = vmatpush1.msra.mxu0 0.0
      %320 = vmatprep.subr.mxu0 0.0
      %321 = vmatpush1.msra.mxu0 0.0
      %322 = vmatprep.subr.mxu0 0.0
      %323 = vmatpush1.msra.mxu0 0.0
      %324 = vmatprep.subr.mxu0 0.0
      %325 = vmatpush1.msra.mxu0 0.0
      %326 = vmatprep.subr.mxu0 0.0
      %327 = vmatpush1.msra.mxu0 0.0
      %328 = vmatprep.subr.mxu0 0.0
      %329 = vmatpush1.msra.mxu0 0.0
      %330 = vmatprep.subr.mxu0 0.0
      %331 = vmatpush1.msra.mxu0 0.0
      %332 = vmatprep.subr.mxu0 0.0
      %333 = vmatpush1.msra.mxu0 0.0
      %334 = vmatprep.subr.mxu0 0.0
      %335 = vmatpush1.msra.mxu0 0.0
      %336 = vmatprep.subr.mxu0 0.0
      %337 = vmatpush1.msra.mxu0 0.0
      %338 = vmatprep.subr.mxu0 0.0
      %339 = vmatpush1.msra.mxu0 0.0
      %340 = vmatprep.subr.mxu0 0.0
      %341 = vmatpush1.msra.mxu0 0.0
      %342 = vmatprep.subr.mxu0 0.0
      %343 = vmatpush1.msra.mxu0 0.0
      %344 = vmatprep.subr.mxu0 0.0
      %345 = vmatpush1.msra.mxu0 0.0
      %346 = vmatprep.mubr.f32.mxu0 0.0
      %347 = vmatmul.mubr.f32.gmra.mrb[0].mxu0 %v271
      %v348 = vpop.f32.mrb[0].mxu0
      %v349 = vadd.f32 0.0, %v348
      %v350 = vpop.f32.mrb[0].mxu0
      %351 = vmatprep.mubr.f32.mxu0 0.0
      %352 = vmatmul.mubr.f32.gmra.mrb[0].mxu0 %v274
      %v353 = vpop.f32.mrb[0].mxu0
      %v354 = vadd.f32 0.0, %v353
      %v355 = vpop.f32.mrb[0].mxu0
      %356 = vmatprep.mubr.f32.mxu0 0.0
      %357 = vmatmul.mubr.f32.gmra.mrb[0].mxu0 %v277
      %v358 = vpop.f32.mrb[0].mxu0
      %v359 = vadd.f32 0.0, %v358
      %v360 = vpop.f32.mrb[0].mxu0
      %361 = vmatprep.mubr.f32.mxu0 0.0
      %362 = vmatmul.mubr.f32.gmra.mrb[0].mxu0 %v280
      %v363 = vpop.f32.mrb[0].mxu0
      %v364 = vadd.f32 0.0, %v363
      %v365 = vpop.f32.mrb[0].mxu0
      %366 = vdwg.mxu0
      %v367 = vadd.f32 %v234, %v349
      %v368 = vadd.f32 %v235, %v354
      %v369 = vadd.f32 %v236, %v359
      %v370 = vadd.f32 %v237, %v364
      %371 = vst.msk [vmem:[#allocation7] sm:$0xff] %vm78, %v367
      %372 = vst.msk [vmem:[#allocation7 + $0x8] sm:$0xff] %vm78, %v368
      %373 = vst.msk [vmem:[#allocation7 + $0x10] sm:$0xff] %vm78, %v369
      %374 = vst.msk [vmem:[#allocation7 + $0x18] sm:$0xff] %vm78, %v370
    $region41: #{tpu_custom_call.1} parent=1 // pred_fallthru
      _
    // Predicated region
    $region42: #{tpu_custom_call.1} parent=1 // pred_check
      %p375 = pneg %p54
    $region43: #{tpu_custom_call.1} parent=1 // pred_check_branch
      %377 = sbr.rel (%p375) target = $region45
    $region44: #{tpu_custom_call.1} parent=1 // pred_region
      %v378 = vld [vmem:[#allocation2] sm:$0xff]
      %v379 = vlog2.pop %v378
      %v380 = vmul.f32 %v379, 0.6931472
      %v381 = vadd.f32 %v380, 2.0
      %s382 = sld [smem:[#allocation8]]
      %v383 = vsel %vm164, %v381, 0.0
      %384 = vadd.xlane.f32.xlu0 %v383
      %v385 = vpop.xlane.xlu0 %384
      %v386 = vrot.slane %v385, 4
      %v387 = vadd.f32 %v385, %v386
      %v388 = vrot.slane %v387, 2
      %v389 = vadd.f32 %v387, %v388
      %v390 = vrot.slane %v389, 1
      %v391 = vadd.f32 %v389, %v390
      %s392 = vtos %v391
      %s393 = sadd.f32 %s382, %s392
      %s394 = scalar_lea.smem [#allocation8], 0
      %395 = sst [smem:[%s394]] %s393
    $region45: #{tpu_custom_call.1} parent=1 // pred_fallthru
      _
    // Predicated region
    $region46: #{tpu_custom_call.1} parent=1 // pred_check
      _
    $region47: #{tpu_custom_call.1} parent=1 // pred_check_branch
      %397 = sbr.rel (%p55) target = $region49
    $region48: #{tpu_custom_call.1} parent=1 // pred_region
      %v398 = vld [vmem:[#allocation3] sm:$0x1]
      %vm399 = vcmask 253952
      %v400 = vsel %vm399, %v398, 0.0
      %401 = vadd.xlane.f32.xlu0 %v400
      %v402 = vpop.xlane.xlu0 %401
      %v403 = vrot.slane %v402, 4
      %v404 = vadd.f32 %v402, %v403
      %v405 = vrot.slane %v404, 2
      %v406 = vadd.f32 %v404, %v405
      %v407 = vrot.slane %v406, 1
      %v408 = vadd.f32 %v406, %v407
      %s409 = vtos %v408
      %v410 = vstv %s409
      %v411 = vrcp.pop %v410
      %v412 = vmul.f32 %v398, %v411
      %v413 = vlog2.pop %v412
      %v414 = vmul.f32 %v413, 0.6931472
      %v415 = vmul.f32 %v412, %v414
      %v416 = vsel %vm399, %v415, 0.0
      %417 = vadd.xlane.f32.xlu0 %v416
      %v418 = vpop.xlane.xlu0 %417
      %v419 = vrot.slane %v418, 4
      %v420 = vadd.f32 %v418, %v419
      %v421 = vrot.slane %v420, 2
      %v422 = vadd.f32 %v420, %v421
      %v423 = vrot.slane %v422, 1
      %v424 = vadd.f32 %v422, %v423
      %s425 = vtos %v424
      %s426 = sadd.f32 %s425, 3.465736
      %v427 = vld [vmem:[#allocation4] sm:$0x1]
      %v428 = vmax.f32 %v427, 1e-24
      %v429 = vrsqrt.pop %v428
      %v430 = vld [vmem:[#allocation5] sm:$0x1]
      %v431 = vmax.f32 %v430, 1e-24
      %v432 = vrsqrt.pop %v431
      %v433 = vld [vmem:[#allocation7] sm:$0xff]
      %v434 = vld [vmem:[#allocation7 + $0x8] sm:$0xff]
      %v435 = vld [vmem:[#allocation7 + $0x10] sm:$0xff]
      %v436 = vld [vmem:[#allocation7 + $0x18] sm:$0xff]
      %v437 = vmul.f32 %v432, 2.0
      %v439 = vlaneseq
      %v440 = vshrl.u32 %v439, 7
      %v441 = vsub.s32 0, %v440
      %v442 = vrot.slane %v437, %v441
      %v444 = vmul.f32 %v433, %v442
      %v445 = vmul.f32 %v434, %v442
      %v446 = vmul.f32 %v435, %v442
      %v447 = vmul.f32 %v436, %v442
      %448 = vxpose.xlu0.b32.start [1/16] %v429, 128
      %449 = vxpose.xlu0.b32.cont [2/16] 0.0, 128
      %450 = vxpose.xlu0.b32.cont [3/16] 0.0, 128
      %451 = vxpose.xlu0.b32.cont [4/16] 0.0, 128
      %452 = vxpose.xlu0.b32.cont [5/16] 0.0, 128
      %453 = vxpose.xlu0.b32.cont [6/16] 0.0, 128
      %454 = vxpose.xlu0.b32.cont [7/16] 0.0, 128
      %455 = vxpose.xlu0.b32.cont [8/16] 0.0, 128
      %456 = vxpose.xlu0.b32.cont [9/16] 0.0, 128
      %457 = vxpose.xlu0.b32.cont [10/16] 0.0, 128
      %458 = vxpose.xlu0.b32.cont [11/16] 0.0, 128
      %459 = vxpose.xlu0.b32.cont [12/16] 0.0, 128
      %460 = vxpose.xlu0.b32.cont [13/16] 0.0, 128
      %461 = vxpose.xlu0.b32.cont [14/16] 0.0, 128
      %462 = vxpose.xlu0.b32.cont [15/16] 0.0, 128
      %463 = vxpose.xlu0.b32.end [16/16] 0.0, 128
      %v464 = vpop.trf.xlu0
      %v465 = vpop.trf.xlu0
      %v466 = vpop.trf.xlu0
      %v467 = vpop.trf.xlu0
      %v468 = vpop.trf.xlu0
      %v469 = vpop.trf.xlu0
      %v470 = vpop.trf.xlu0
      %v471 = vpop.trf.xlu0
      %v472 = vpop.trf.xlu0
      %v473 = vpop.trf.xlu0
      %v474 = vpop.trf.xlu0
      %v475 = vpop.trf.xlu0
      %v476 = vpop.trf.xlu0
      %v477 = vpop.trf.xlu0
      %v478 = vpop.trf.xlu0
      %v479 = vpop.trf.xlu0
      %481 = vset.pattern.permute.xlu0 0
      %482 = vperm.xlu0 %481, %v464
      %v483 = vpop.permute.xlu0 %482
      %486 = vset.pattern.permute.xlu0 0
      %487 = vperm.xlu0 %486, %v465
      %v488 = vpop.permute.xlu0 %487
      %491 = vset.pattern.permute.xlu0 0
      %492 = vperm.xlu0 %491, %v466
      %v493 = vpop.permute.xlu0 %492
      %496 = vset.pattern.permute.xlu0 0
      %497 = vperm.xlu0 %496, %v467
      %v498 = vpop.permute.xlu0 %497
      %v500 = vmul.f32 %v444, %v483
      %v501 = vmul.f32 %v445, %v488
      %v502 = vmul.f32 %v446, %v493
      %v503 = vmul.f32 %v447, %v498
      %v504 = vld [vmem:[#allocation6] sm:$0x1]
      %v505 = vmul.f32 %v504, %v429
      %v506 = vmul.f32 %v505, %v432
      %v507 = vmul.f32 %v506, 2.0
      %v508 = vsub.f32 %v500, 2.0
      %v509 = vsub.f32 %v501, 2.0
      %v510 = vsub.f32 %v502, 2.0
      %v511 = vsub.f32 %v503, 2.0
      %v512 = vmul.f32 %v508, 1.442695
      %v513 = vpow.pop %v512
      %v514 = vmul.f32 %v509, 1.442695
      %v515 = vpow.pop %v514
      %v516 = vmul.f32 %v510, 1.442695
      %v517 = vpow.pop %v516
      %v518 = vmul.f32 %v511, 1.442695
      %v519 = vpow.pop %v518
      %v520 = vsel %vm78, %v513, 0.0
      %521 = vadd.xlane.f32.xlu0 %v520
      %v522 = vpop.xlane.xlu0 %521
      %v523 = vsel %vm78, %v515, 0.0
      %524 = vadd.xlane.f32.xlu0 %v523
      %v525 = vpop.xlane.xlu0 %524
      %v526 = vsel %vm78, %v517, 0.0
      %527 = vadd.xlane.f32.xlu0 %v526
      %v528 = vpop.xlane.xlu0 %527
      %v529 = vsel %vm78, %v519, 0.0
      %530 = vadd.xlane.f32.xlu0 %v529
      %v531 = vpop.xlane.xlu0 %530
      %v532 = vlog2.pop %v522
      %v533 = vmul.f32 %v532, 0.6931472
      %v534 = vlog2.pop %v525
      %v535 = vmul.f32 %v534, 0.6931472
      %v536 = vlog2.pop %v528
      %v537 = vmul.f32 %v536, 0.6931472
      %v538 = vlog2.pop %v531
      %v539 = vmul.f32 %v538, 0.6931472
      %v540 = vadd.f32 %v533, 2.0
      %v541 = vadd.f32 %v535, 2.0
      %v542 = vadd.f32 %v537, 2.0
      %v543 = vadd.f32 %v539, 2.0
      %v544 = vsel %vm164, %v540, 0.0
      %v545 = vsel %vm164, %v541, 0.0
      %v546 = vadd.f32 %v544, %v545
      %v547 = vsel %vm164, %v542, 0.0
      %v548 = vadd.f32 %v546, %v547
      %v549 = vsel %vm164, %v543, 0.0
      %v550 = vadd.f32 %v548, %v549
      %551 = vadd.xlane.f32.xlu0 %v550
      %v552 = vpop.xlane.xlu0 %551
      %v553 = vrot.slane %v552, 4
      %v554 = vadd.f32 %v552, %v553
      %v555 = vrot.slane %v554, 2
      %v556 = vadd.f32 %v554, %v555
      %v557 = vrot.slane %v556, 1
      %v558 = vadd.f32 %v556, %v557
      %s559 = vtos %v558
      %v560 = vsel %vm399, %v507, 0.0
      %561 = vadd.xlane.f32.xlu0 %v560
      %v562 = vpop.xlane.xlu0 %561
      %v563 = vrot.slane %v562, 4
      %v564 = vadd.f32 %v562, %v563
      %v565 = vrot.slane %v564, 2
      %v566 = vadd.f32 %v564, %v565
      %v567 = vrot.slane %v566, 1
      %v568 = vadd.f32 %v566, %v567
      %s569 = vtos %v568
      %s570 = ssub.f32 %s559, %s569
      %v571 = vrcp.pop 32.0
      %s572 = vtos %v571
      %s573 = smul.f32 %s570, %s572
      %s574 = sld [smem:[#allocation8]]
      %v575 = vrcp.pop 8.0
      %s576 = vtos %v575
      %s577 = smul.f32 %s574, %s576
      %s578 = sadd.f32 %s577, %s573
      %s579 = sadd.f32 %s578, %s426
      %s580 = scalar_lea.smem [#allocation15], 0
      %581 = sst [smem:[%s580]] %s579
    $region49: #{tpu_custom_call.1} parent=1 // pred_fallthru
      _
    // Predicated region
    $region50: #{tpu_custom_call.1} parent=1 // pred_check
      _
    $region51: #{tpu_custom_call.1} parent=1 // pred_check_branch
      %583 = sbr.rel (0) target = $region53
    $region52: #{tpu_custom_call.1} parent=1 // pred_region
      %s585 = ssub.s32 16, 16
      %586 = vsyncadd [#allocation11], %s585
      %589 = dma.smem_to_hbm [#allocation15], 16, %s4, [#allocation11]
    $region53: #{tpu_custom_call.1} parent=1 // pred_fallthru
      _
    // Predicated region
    $region54: #{tpu_custom_call.1} parent=1 // pred_check
      _
    $region55: #{tpu_custom_call.1} parent=1 // pred_check_branch
      %591 = sbr.rel (0) target = $region57
    $region56: #{tpu_custom_call.1} parent=1 // pred_region
      %592 = dma.done [#allocation11], 16
    $region57: #{tpu_custom_call.1} parent=1 // pred_fallthru
      _
    %593 = sfence
    %594 = vsyncpa [#allocation10], 1
    %595 = vsyncpa [#allocation13], 1
    %596 = vsyncpa [#allocation11], 1

</llo_original>
